<compile_context>
chip_gen: v5e
topology: v5e:2x2
jax: 0.10.0
libtpu: 0.0.40
codegen_flags: <defaults>
</compile_context>

<pallas_src>
import functools

import jax
import jax.numpy as jnp
from jax.experimental import pallas as pl
from jax.experimental.pallas import tpu as pltpu


def _round_up(x: int, m: int) -> int:
    return ((x + m - 1) // m) * m


def _skce_kernel(p_ref, w_ref, y_ref, out_ref, *, sigma, n_pairs, tile_p,
                 need_mask):
    """One (split s, tile t) grid step over TILE_P sample-pairs on the lane axis.

    p_ref  : (2, M, K, TILE_P)  float  predictions of pair members (2i, 2i+1)
    w_ref  : (2, M, TILE_P)     float  ensemble weights
    y_ref  : (2, TILE_P)        int32  labels
    out_ref: (8, TILE_P)        f32    per-split lane-wise partial sums of h_i
                                       (resident across the t axis; all 8
                                        sublanes hold identical running sums)
    """
    t = pl.program_id(1)

    @pl.when(t == 0)
    def _init():
        out_ref[...] = jnp.zeros_like(out_ref)

    p = p_ref[...].astype(jnp.float32)      # (2, M, K, TILE_P)
    w = w_ref[...].astype(jnp.float32)      # (2, M, TILE_P)
    y = y_ref[...]                          # (2, TILE_P) int32

    # Convex combination over the M predictors -> p_bar for both pair members.
    # M is a small slab axis; this is a handful of VPU multiply-adds per vreg.
    p_bar = jnp.sum(w[:, :, None, :] * p, axis=1)          # (2, K, TILE_P)
    p_i, p_j = p_bar[0], p_bar[1]                          # (K, TILE_P)
    k_classes = p_i.shape[0]

    # One-hot labels via sublane iota compare.
    classes = jax.lax.broadcasted_iota(jnp.int32, (k_classes, tile_p), 0)
    yoh_i = (classes == y[0:1, :]).astype(jnp.float32)     # (K, TILE_P)
    yoh_j = (classes == y[1:2, :]).astype(jnp.float32)     # (K, TILE_P)

    # Total-variation distance between the paired p_bar vectors (sublane
    # reduce -> XLU slot), exp -> EUP slot; both off the VPU critical path.
    d = 0.5 * jnp.sum(jnp.abs(p_i - p_j), axis=0, keepdims=True)        # (1, TILE_P)
    gamma = jnp.exp(-d * (1.0 / sigma))
    h = gamma * jnp.sum((yoh_i - p_i) * (yoh_j - p_j), axis=0, keepdims=True)

    if need_mask:
        # Zero lanes past the true number of pairs (wrapper padding). Only
        # emitted when padding exists (static flag).
        s = pl.program_id(0)
        n_t = pl.num_programs(1)
        base = (s * n_t + t) * tile_p
        lane = base + jax.lax.broadcasted_iota(jnp.int32, (1, tile_p), 1)
        h = jnp.where(lane < n_pairs, h, 0.0)                           # (1, TILE_P)

    # Plain broadcast vadd into the resident output block: every sublane
    # accumulates the same (1, TILE_P) row; epilogue reads sublane 0.
    out_ref[...] = out_ref[...] + h


def skce_loss(p_preds, weights_l, y, *, bw=2.0, use_square=True,
              num_splits=2, max_tile_p=2048):
    """Pallas implementation of SKCELoss.forward (use_median_bw=False)."""
    N, M, K = p_preds.shape
    P = N // 2
    if P == 0:
        raise ValueError("SKCE_ul needs at least 2 samples")

    # SKCE_ul drops a trailing unpaired sample (matches the torch estimator).
    p_preds = p_preds[: 2 * P]
    weights_l = weights_l[: 2 * P]
    y = y[: 2 * P]

    # Keep bf16 inputs bf16 (the op is HBM-bound); everything else -> f32.
    if p_preds.dtype != jnp.bfloat16:
        p_preds = p_preds.astype(jnp.float32)
    if weights_l.dtype != jnp.bfloat16:
        weights_l = weights_l.astype(jnp.float32)
    y = y.astype(jnp.int32)

    # Contiguous pairing (no strided even/odd slices) and put the big pair
    # axis P on the lane dimension so vregs are full width.
    p = jnp.transpose(p_preds.reshape(P, 2, M, K), (1, 2, 3, 0))   # (2, M, K, P)
    w = jnp.transpose(weights_l.reshape(P, 2, M), (1, 2, 0))       # (2, M, P)
    yp = jnp.transpose(y.reshape(P, 2), (1, 0))                    # (2, P)

    # Grid sizing: S parallel splits (both v7x TensorCores), T reduction tiles
    # per split.  Tiny inputs collapse to a single split (no all-pad split).
    S = max(1, min(int(num_splits), -(-P // 128)))
    pairs_per_split = -(-P // S)

    # Pick TILE_P as large as possible (amortize ~0.35us/step) while the
    # double-buffered input blocks stay well inside scoped VMEM (64 MiB on
    # v7x, default scoped limit 32 MiB).
    p_esz = jnp.dtype(p.dtype).itemsize
    w_esz = jnp.dtype(w.dtype).itemsize
    per_lane_bytes = 2 * (2 * M * K * p_esz + 2 * M * w_esz + 2 * 4) + 8 * 4
    vmem_budget = 12 * 1024 * 1024
    cap = max(128, (vmem_budget // per_lane_bytes) // 128 * 128)
    tile_p = min(_round_up(int(max_tile_p), 128), cap,
                 _round_up(pairs_per_split, 128))
    T = -(-P // (S * tile_p))

    p_pad = S * T * tile_p
    pad = p_pad - P
    if pad:
        p = jnp.pad(p, ((0, 0), (0, 0), (0, 0), (0, pad)))
        w = jnp.pad(w, ((0, 0), (0, 0), (0, pad)))
        yp = jnp.pad(yp, ((0, 0), (0, pad)))

    kernel = functools.partial(_skce_kernel, sigma=float(bw),
                               n_pairs=P, tile_p=tile_p,
                               need_mask=bool(pad))

    partials = pl.pallas_call(
        kernel,
        out_shape=jax.ShapeDtypeStruct((S * 8, tile_p), jnp.float32),
        grid=(S, T),
        in_specs=[
            pl.BlockSpec((2, M, K, tile_p), lambda s, t: (0, 0, 0, s * T + t)),
            pl.BlockSpec((2, M, tile_p), lambda s, t: (0, 0, s * T + t)),
            pl.BlockSpec((2, tile_p), lambda s, t: (0, s * T + t)),
        ],
        out_specs=pl.BlockSpec((8, tile_p), lambda s, t: (s, 0)),
        compiler_params=pltpu.CompilerParams(
            dimension_semantics=("parallel", "arbitrary")),
    )(p, w, yp)

    # Scalar epilogue (tiny): every sublane of a split holds identical sums,
    # so read sublane 0, mean over pairs, then square.
    loss = jnp.sum(partials.reshape(S, 8, tile_p)[:, 0, :]) / P
    if use_square:
        loss = loss * loss
    return loss


def skce_loss_ref(p_preds, weights_l, y, *, bw=2.0, use_square=True):
    """Pure-JAX reference of the same forward pass (for correctness check)."""
    N, _, K = p_preds.shape
    P = N // 2
    p_preds = p_preds[: 2 * P].astype(jnp.float32)
    weights_l = weights_l[: 2 * P].astype(jnp.float32)
    y = y[: 2 * P]
    p_bar = jnp.sum(weights_l[:, :, None] * p_preds, axis=1)
    y_oh = jax.nn.one_hot(y, K, dtype=jnp.float32)
    p_i, p_j = p_bar[0::2], p_bar[1::2]
    y_i, y_j = y_oh[0::2], y_oh[1::2]
    d = 0.5 * jnp.sum(jnp.abs(p_i - p_j), axis=-1)
    h = jnp.exp(-d / bw) * jnp.sum((y_i - p_i) * (y_j - p_j), axis=-1)
    loss = jnp.mean(h)
    return loss * loss if use_square else loss


if __name__ == "__main__":
    key = jax.random.PRNGKey(0)

    skce_jit = jax.jit(functools.partial(skce_loss, bw=2.0, use_square=True))

    # Case 1: tiny, exact tiling.
    k1, k2, k3 = jax.random.split(key, 3)
    N, M, K = 8, 4, 10  # n_samples, n_predictors, n_classes
    p_preds = jax.nn.softmax(jax.random.normal(k1, (N, M, K), jnp.float32), axis=-1)
    weights_l = jax.nn.softmax(jax.random.normal(k2, (N, M), jnp.float32), axis=-1)
    y = jax.random.randint(k3, (N,), 0, K, dtype=jnp.int32)

    out = skce_jit(p_preds, weights_l, y)
    jax.block_until_ready(out)
    ref = skce_loss_ref(p_preds, weights_l, y, bw=2.0, use_square=True)
    assert jnp.allclose(out, ref, atol=2e-6, rtol=1e-4), (out, ref)

    # Case 2: odd N (drops trailing sample) + lane padding + 2 splits.
    k4, k5, k6 = jax.random.split(jax.random.PRNGKey(1), 3)
    N2 = 301
    p2 = jax.nn.softmax(jax.random.normal(k4, (N2, M, K), jnp.float32), axis=-1)
    w2 = jax.nn.softmax(jax.random.normal(k5, (N2, M), jnp.float32), axis=-1)
    y2 = jax.random.randint(k6, (N2,), 0, K, dtype=jnp.int32)

    out2 = skce_jit(p2, w2, y2)
    jax.block_until_ready(out2)
    ref2 = skce_loss_ref(p2, w2, y2, bw=2.0, use_square=True)
    assert jnp.allclose(out2, ref2, atol=2e-6, rtol=1e-4), (out2, ref2)

    # TODO(synk): use_median_bw=True (median_heuristic over all pairwise TV
    # distances) is not implemented; default constructor path (bw=2.0) only.
    print("KERNEL_OK")
</pallas_src>

<mosaic_0001>
module attributes {stable_mosaic.version = 11 : i64} {
  func.func @_skce_kernel(%arg0: i32, %arg1: i32, %arg2: memref<2x4x10x128xf32, #tpu.memory_space<vmem>>, %arg3: memref<2x4x128xf32, #tpu.memory_space<vmem>>, %arg4: memref<2x128xi32, #tpu.memory_space<vmem>>, %arg5: memref<8x128xf32, #tpu.memory_space<vmem>>) attributes {dimension_semantics = [#tpu.dimension_semantics<parallel>, #tpu.dimension_semantics<arbitrary>], iteration_bounds = array<i64: 1, 1>, scalar_prefetch = 0 : i64, scratch_operands = 0 : i64, tpu.core_type = #tpu.core_type<tc>, window_params = [{transform_indices = @transform_0, window_bounds = array<i64: 2, 4, 10, 128>}, {transform_indices = @transform_1, window_bounds = array<i64: 2, 4, 128>}, {transform_indices = @transform_2, window_bounds = array<i64: 2, 128>}, {transform_indices = @transform_3, window_bounds = array<i64: 8, 128>}]} {
    %c0_i32 = arith.constant 0 : i32
    %0 = arith.cmpi eq, %arg1, %c0_i32 : i32
    %1 = arith.extui %0 : i1 to i32
    %c0_i32_0 = arith.constant 0 : i32
    %2 = arith.cmpi ne, %1, %c0_i32_0 : i32
    scf.if %2 {
      %cst_19 = arith.constant 0.000000e+00 : f32
      %56 = vector.broadcast %cst_19 : f32 to vector<8x128xf32>
      %c0_20 = arith.constant 0 : index
      %c0_21 = arith.constant 0 : index
      %57 = vector.load %arg5[%c0_20, %c0_21] : memref<8x128xf32, #tpu.memory_space<vmem>>, vector<8x128xf32>
      tpu.vector_store %arg5[%c0_20, %c0_21], %56 {strides = array<i32>} : memref<8x128xf32, #tpu.memory_space<vmem>>, vector<8x128xf32>,
    } else {
    }
    %c0 = arith.constant 0 : index
    %c0_1 = arith.constant 0 : index
    %c0_2 = arith.constant 0 : index
    %c0_3 = arith.constant 0 : index
    %3 = vector.load %arg2[%c0, %c0_1, %c0_2, %c0_3] : memref<2x4x10x128xf32, #tpu.memory_space<vmem>>, vector<2x4x10x128xf32>
    %c0_4 = arith.constant 0 : index
    %c0_5 = arith.constant 0 : index
    %c0_6 = arith.constant 0 : index
    %4 = vector.load %arg3[%c0_4, %c0_5, %c0_6] : memref<2x4x128xf32, #tpu.memory_space<vmem>>, vector<2x4x128xf32>
    %c0_7 = arith.constant 0 : index
    %c0_8 = arith.constant 0 : index
    %5 = vector.load %arg4[%c0_7, %c0_8] : memref<2x128xi32, #tpu.memory_space<vmem>>, vector<2x128xi32>
    %6 = vector.shape_cast %4 : vector<2x4x128xf32> to vector<2x4x1x128xf32>
    %7 = vector.broadcast %6 : vector<2x4x1x128xf32> to vector<2x4x10x128xf32>
    %8 = arith.mulf %7, %3 : vector<2x4x10x128xf32>
    %cst = arith.constant dense<0.000000e+00> : vector<2x10x128xf32>
    %9 = vector.multi_reduction <add>, %8, %cst [1] : vector<2x4x10x128xf32> to vector<2x10x128xf32>
    %10 = vector.extract_strided_slice %9 {offsets = [0, 0, 0], sizes = [1, 10, 128], strides = [1, 1, 1]} : vector<2x10x128xf32> to vector<1x10x128xf32>
    %11 = vector.shape_cast %10 : vector<1x10x128xf32> to vector<10x128xf32>
    %12 = vector.extract_strided_slice %9 {offsets = [1, 0, 0], sizes = [1, 10, 128], strides = [1, 1, 1]} : vector<2x10x128xf32> to vector<1x10x128xf32>
    %13 = vector.shape_cast %12 : vector<1x10x128xf32> to vector<10x128xf32>
    %14 = tpu.iota {dimensions = array<i32: 0>} : vector<10x128xi32>
    %15 = vector.extract_strided_slice %5 {offsets = [0, 0], sizes = [1, 128], strides = [1, 1]} : vector<2x128xi32> to vector<1x128xi32>
    %16 = vector.broadcast %15 : vector<1x128xi32> to vector<10x128xi32>
    %17 = arith.cmpi eq, %14, %16 : vector<10x128xi32>
    %18 = arith.extui %17 : vector<10x128xi1> to vector<10x128xi32>
    %19 = arith.sitofp %18 : vector<10x128xi32> to vector<10x128xf32>
    %20 = vector.extract_strided_slice %5 {offsets = [1, 0], sizes = [1, 128], strides = [1, 1]} : vector<2x128xi32> to vector<1x128xi32>
    %21 = vector.broadcast %20 : vector<1x128xi32> to vector<10x128xi32>
    %22 = arith.cmpi eq, %14, %21 : vector<10x128xi32>
    %23 = arith.extui %22 : vector<10x128xi1> to vector<10x128xi32>
    %24 = arith.sitofp %23 : vector<10x128xi32> to vector<10x128xf32>
    %25 = arith.subf %11, %13 : vector<10x128xf32>
    %26 = math.absf %25 : vector<10x128xf32>
    %cst_9 = arith.constant dense<0.000000e+00> : vector<128xf32>
    %27 = vector.multi_reduction <add>, %26, %cst_9 [0] : vector<10x128xf32> to vector<128xf32>
    %28 = vector.shape_cast %27 : vector<128xf32> to vector<1x128xf32>
    %cst_10 = arith.constant 5.000000e-01 : f32
    %29 = vector.broadcast %cst_10 : f32 to vector<1x128xf32>
    %30 = arith.mulf %29, %28 : vector<1x128xf32>
    %cst_11 = arith.constant 0.000000e+00 : f32
    %31 = vector.broadcast %cst_11 : f32 to vector<1x128xf32>
    %32 = arith.subf %31, %30 : vector<1x128xf32>
    %cst_12 = arith.constant 5.000000e-01 : f32
    %33 = vector.broadcast %cst_12 : f32 to vector<1x128xf32>
    %34 = arith.mulf %32, %33 : vector<1x128xf32>
    %35 = math.exp %34 : vector<1x128xf32>
    %36 = arith.subf %19, %11 : vector<10x128xf32>
    %37 = arith.subf %24, %13 : vector<10x128xf32>
    %38 = arith.mulf %36, %37 : vector<10x128xf32>
    %cst_13 = arith.constant dense<0.000000e+00> : vector<128xf32>
    %39 = vector.multi_reduction <add>, %38, %cst_13 [0] : vector<10x128xf32> to vector<128xf32>
    %40 = vector.shape_cast %39 : vector<128xf32> to vector<1x128xf32>
    %41 = arith.mulf %35, %40 : vector<1x128xf32>
    %c1_i32 = arith.constant 1 : i32
    %42 = arith.muli %arg0, %c1_i32 : i32
    %43 = arith.addi %42, %arg1 : i32
    %c128_i32 = arith.constant 128 : i32
    %44 = arith.muli %43, %c128_i32 : i32
    %45 = tpu.iota {dimensions = array<i32: 1>} : vector<1x128xi32>
    %46 = vector.broadcast %44 : i32 to vector<1x128xi32>
    %47 = arith.addi %46, %45 : vector<1x128xi32>
    %c4_i32 = arith.constant 4 : i32
    %48 = vector.broadcast %c4_i32 : i32 to vector<1x128xi32>
    %49 = arith.cmpi slt, %47, %48 : vector<1x128xi32>
    %cst_14 = arith.constant 0.000000e+00 : f32
    %50 = vector.broadcast %cst_14 : f32 to vector<1x128xf32>
    %51 = arith.select %49, %41, %50 : vector<1x128xi1>, vector<1x128xf32>
    %c0_15 = arith.constant 0 : index
    %c0_16 = arith.constant 0 : index
    %52 = vector.load %arg5[%c0_15, %c0_16] : memref<8x128xf32, #tpu.memory_space<vmem>>, vector<8x128xf32>
    %53 = vector.broadcast %51 : vector<1x128xf32> to vector<8x128xf32>
    %54 = arith.addf %52, %53 : vector<8x128xf32>
    %c0_17 = arith.constant 0 : index
    %c0_18 = arith.constant 0 : index
    %55 = vector.load %arg5[%c0_17, %c0_18] : memref<8x128xf32, #tpu.memory_space<vmem>>, vector<8x128xf32>
    tpu.vector_store %arg5[%c0_17, %c0_18], %54 {strides = array<i32>} : memref<8x128xf32, #tpu.memory_space<vmem>>, vector<8x128xf32>,
    return
  }
  func.func @transform_0(%arg0: i32, %arg1: i32) -> (i32, i32, i32, i32) {
    %c1_i32 = arith.constant 1 : i32
    %0 = arith.muli %arg0, %c1_i32 : i32
    %1 = arith.addi %0, %arg1 : i32
    %c0_i32 = arith.constant 0 : i32
    %c0_i32_0 = arith.constant 0 : i32
    %c0_i32_1 = arith.constant 0 : i32
    %c0_i32_2 = arith.constant 0 : i32
    return %c0_i32, %c0_i32_0, %c0_i32_1, %1 : i32, i32, i32, i32
  }
  func.func @transform_1(%arg0: i32, %arg1: i32) -> (i32, i32, i32) {
    %c1_i32 = arith.constant 1 : i32
    %0 = arith.muli %arg0, %c1_i32 : i32
    %1 = arith.addi %0, %arg1 : i32
    %c0_i32 = arith.constant 0 : i32
    %c0_i32_0 = arith.constant 0 : i32
    %c0_i32_1 = arith.constant 0 : i32
    return %c0_i32, %c0_i32_0, %1 : i32, i32, i32
  }
  func.func @transform_2(%arg0: i32, %arg1: i32) -> (i32, i32) {
    %c1_i32 = arith.constant 1 : i32
    %0 = arith.muli %arg0, %c1_i32 : i32
    %1 = arith.addi %0, %arg1 : i32
    %c0_i32 = arith.constant 0 : i32
    %c0_i32_0 = arith.constant 0 : i32
    return %c0_i32, %1 : i32, i32
  }
  func.func @transform_3(%arg0: i32, %arg1: i32) -> (i32, i32) {
    %c0_i32 = arith.constant 0 : i32
    %c0_i32_0 = arith.constant 0 : i32
    return %arg0, %c0_i32 : i32, i32
  }
}

</mosaic_0001>

<llo_original>
// kernel: skce_loss.1
$region0: #{skce_loss.1}
  #allocation0 [shape = 'u32[]', space=smem, size = 0x4, offset = 0x4, fixed_abs, tag = 'smem constant byte address 0x4 - core index']
  #allocation1 [shape = 'u32[72,128]{1,0:T(1,128)}', space=vmem, size = 0x9000, scoped, tag = 'internal scratch']
  %s0 = inlined_call_operand.vmem [shape: f32[2,4,10,128], index: 0, kind: input, shape index: {}]
  %s1 = inlined_call_operand.vmem [shape: f32[2,4,128], index: 1, kind: input, shape index: {}]
  %s2 = inlined_call_operand.vmem [shape: s32[2,128], index: 2, kind: input, shape index: {}]
  %s3 = inlined_call_operand.vmem [shape: f32[8,128], index: 3, kind: output, shape index: {}]
  %s4 = sld [smem:[#allocation0]]
  $region26: #{skce_loss.1} parent=0
    _
  %s6 = ssub.s32 1, %s4
  %s7 = scalar_select 0, %s6, %s4
  // Predicated region
  $region2: #{skce_loss.1} parent=0 // pred_check
    _
  $region3: #{skce_loss.1} parent=0 // pred_check_branch
    %9 = sbr.rel (0) target = $region5
  $region4: #{skce_loss.1} parent=0 // pred_region
    %s10 = sadd.s32 0, 0
    %p11 = scmp.lt.s32.totalorder %s10, 0
    %s12 = scalar_select %p11, %s10, 0
    %s13 = smul.addr %s12, 8
    %s14 = scalar_lea.vmem %s0, %s13
    %s15 = sadd.s32 0, 0
  $region5: #{skce_loss.1} parent=0 // pred_fallthru
    _
  // Predicated region
  $region6: #{skce_loss.1} parent=0 // pred_check
    _
  $region7: #{skce_loss.1} parent=0 // pred_check_branch
    %17 = sbr.rel (0) target = $region9
  $region8: #{skce_loss.1} parent=0 // pred_region
    %s18 = sadd.s32 0, 0
    %p19 = scmp.lt.s32.totalorder %s18, 0
    %s20 = scalar_select %p19, %s18, 0
    %s21 = smul.addr %s20, 4
    %s22 = scalar_lea.vmem %s1, %s21
    %s23 = sadd.s32 0, 0
  $region9: #{skce_loss.1} parent=0 // pred_fallthru
    _
  // Predicated region
  $region10: #{skce_loss.1} parent=0 // pred_check
    _
  $region11: #{skce_loss.1} parent=0 // pred_check_branch
    %25 = sbr.rel (0) target = $region13
  $region12: #{skce_loss.1} parent=0 // pred_region
    %s26 = sadd.s32 0, 0
    %p27 = scmp.lt.s32.totalorder %s26, 0
    %s28 = scalar_select %p27, %s26, 0
    %s29 = smul.addr %s28, 2
    %s30 = scalar_lea.vmem %s2, %s29
    %s31 = sadd.s32 0, 0
  $region13: #{skce_loss.1} parent=0 // pred_fallthru
    _
  %s32 = sadd.s32 0, 0
  %p33 = scmp.lt.s32.totalorder %s32, 0
  %s34 = scalar_select %p33, %s32, 0
  %s35 = smul.addr %s34, 8
  %s36 = scalar_lea.vmem %s0, %s35
  %s37 = sadd.s32 0, 0
  %p38 = scmp.lt.s32.totalorder %s37, 0
  %s39 = scalar_select %p38, %s37, 0
  %s40 = smul.addr %s39, 4
  %s41 = scalar_lea.vmem %s1, %s40
  %s42 = sadd.s32 0, 0
  %p43 = scmp.lt.s32.totalorder %s42, 0
  %s44 = scalar_select %p43, %s42, 0
  %s45 = smul.addr %s44, 2
  %s46 = scalar_lea.vmem %s2, %s45
  %s47 = sadd.s32 0, 0
  %p48 = scmp.lt.s32.totalorder %s47, 0
  %s49 = scalar_select %p48, %s47, 0
  %s50 = smul.addr %s49, 8
  %s51 = scalar_lea.vmem %s0, %s50
  %s52 = sadd.s32 0, 0
  %s53 = sadd.s32 0, 0
  %p54 = scmp.lt.s32.totalorder %s53, 0
  %s55 = scalar_select %p54, %s53, 0
  %s56 = smul.addr %s55, 4
  %s57 = scalar_lea.vmem %s1, %s56
  %s58 = sadd.s32 0, 0
  %s59 = sadd.s32 0, 0
  %p60 = scmp.lt.s32.totalorder %s59, 0
  %s61 = scalar_select %p60, %s59, 0
  %s62 = smul.addr %s61, 2
  %s63 = scalar_lea.vmem %s2, %s62
  %s64 = sadd.s32 0, 0
  %p65 = scmp.eq.s32.totalorder 0, 0
  // Predicated region
  $region14: #{skce_loss.1} parent=0 // pred_check
    %p66 = pneg %p65
  $region15: #{skce_loss.1} parent=0 // pred_check_branch
    %68 = sbr.rel (%p66) target = $region17
  $region16: #{skce_loss.1} parent=0 // pred_region
    %69 = vst [vmem:[%s3] sm:$0xff] 0.0
  $region17: #{skce_loss.1} parent=0 // pred_fallthru
    _
  %v70 = vld [vmem:[%s51] sm:$0xff]
  %v71 = vld [vmem:[%s51 + $0x8] sm:$0x3]
  %v72 = vld [vmem:[%s51 + $0x10] sm:$0xff]
  %v73 = vld [vmem:[%s51 + $0x18] sm:$0x3]
  %v74 = vld [vmem:[%s51 + $0x20] sm:$0xff]
  %v75 = vld [vmem:[%s51 + $0x28] sm:$0x3]
  %v76 = vld [vmem:[%s51 + $0x30] sm:$0xff]
  %v77 = vld [vmem:[%s51 + $0x38] sm:$0x3]
  %v78 = vld [vmem:[%s51 + $0x40] sm:$0xff]
  %v79 = vld [vmem:[%s51 + $0x48] sm:$0x3]
  %v80 = vld [vmem:[%s51 + $0x50] sm:$0xff]
  %v81 = vld [vmem:[%s51 + $0x58] sm:$0x3]
  %v82 = vld [vmem:[%s51 + $0x60] sm:$0xff]
  %v83 = vld [vmem:[%s51 + $0x68] sm:$0x3]
  %v84 = vld [vmem:[%s51 + $0x70] sm:$0xff]
  %v85 = vld [vmem:[%s51 + $0x78] sm:$0x3]
  %v86 = vld [vmem:[%s57] sm:$0xf]
  %v87 = vld [vmem:[%s57 + $0x4] sm:$0xf]
  %v88 = vld [vmem:[%s63] sm:$0x3]
  %v91 = vrot.slane %v86, 1
  %v92 = vrot.slane %v86, 2
  %v93 = vrot.slane %v86, 3
  %v94 = vrot.slane %v87, 1
  %v95 = vrot.slane %v87, 2
  %v96 = vrot.slane %v87, 3
  %v97 = vperm.slane %v86, 0
  %v98 = vperm.slane %v91, 0
  %v99 = vperm.slane %v92, 0
  %v100 = vperm.slane %v93, 0
  %v101 = vperm.slane %v87, 0
  %v102 = vperm.slane %v94, 0
  %v103 = vperm.slane %v95, 0
  %v104 = vperm.slane %v96, 0
  %v113 = vmul.f32 %v97, %v70
  %v114 = vmul.f32 %v97, %v71
  %v115 = vmul.f32 %v98, %v72
  %v116 = vmul.f32 %v98, %v73
  %v117 = vmul.f32 %v99, %v74
  %v118 = vmul.f32 %v99, %v75
  %v119 = vmul.f32 %v100, %v76
  %v120 = vmul.f32 %v100, %v77
  %v121 = vmul.f32 %v101, %v78
  %v122 = vmul.f32 %v101, %v79
  %v123 = vmul.f32 %v102, %v80
  %v124 = vmul.f32 %v102, %v81
  %v125 = vmul.f32 %v103, %v82
  %v126 = vmul.f32 %v103, %v83
  %v127 = vmul.f32 %v104, %v84
  %v128 = vmul.f32 %v104, %v85
  %v129 = vadd.f32 %v113, %v115
  %v130 = vadd.f32 %v129, %v117
  %v131 = vadd.f32 %v130, %v119
  %vm132 = vcmask 1041408
  %v133 = vsel %vm132, %v114, 0.0
  %v134 = vsel %vm132, %v116, 0.0
  %v135 = vadd.f32 %v133, %v134
  %v136 = vsel %vm132, %v118, 0.0
  %v137 = vadd.f32 %v135, %v136
  %v138 = vsel %vm132, %v120, 0.0
  %v139 = vadd.f32 %v137, %v138
  %v140 = vadd.f32 %v121, %v123
  %v141 = vadd.f32 %v140, %v125
  %v142 = vadd.f32 %v141, %v127
  %v143 = vsel %vm132, %v122, 0.0
  %v144 = vsel %vm132, %v124, 0.0
  %v145 = vadd.f32 %v143, %v144
  %v146 = vsel %vm132, %v126, 0.0
  %v147 = vadd.f32 %v145, %v146
  %v148 = vsel %vm132, %v128, 0.0
  %v149 = vadd.f32 %v147, %v148
  %v150 = vlaneseq
  %v151 = vshrl.u32 %v150, 7
  %v152 = vadd.s32 %v151, 8
  %v153 = vperm.slane %v88, 0
  %vm154 = vcmp.eq.s32.totalorder %v151, %v153
  %vm155 = vcmp.eq.s32.totalorder %v152, %v153
  %v156 = vsel %vm154, 1, 0
  %v157 = vsel %vm155, 1, 0
  %v158 = vcvt.s32.f32 %v156
  %v159 = vcvt.s32.f32 %v157
  %v160 = vperm.slane %v88, 1
  %vm161 = vcmp.eq.s32.totalorder %v151, %v160
  %vm162 = vcmp.eq.s32.totalorder %v152, %v160
  %v163 = vsel %vm161, 1, 0
  %v164 = vsel %vm162, 1, 0
  %v165 = vcvt.s32.f32 %v163
  %v166 = vcvt.s32.f32 %v164
  %v167 = vsub.f32 %v131, %v142
  %v168 = vsub.f32 %v139, %v149
  %v169 = vand.u32 2147483647, %v167
  %v170 = vand.u32 2147483647, %v168
  %v171 = vsel %vm132, %v170, 0.0
  %v172 = vadd.f32 %v169, %v171
  %v173 = vrot.slane %v172, 4
  %v174 = vadd.f32 %v172, %v173
  %v175 = vrot.slane %v174, 2
  %v176 = vadd.f32 %v174, %v175
  %v177 = vrot.slane %v176, 1
  %v178 = vadd.f32 %v176, %v177
  %v179 = vmul.f32 %v178, 0.5
  %v180 = vsub.f32 0.0, %v179
  %v181 = vmul.f32 %v180, 0.5
  %v182 = vmul.f32 %v181, 1.442695
  %v183 = vpow.pop %v182
  %v184 = vsub.f32 %v158, %v131
  %v185 = vsub.f32 %v159, %v139
  %v186 = vsub.f32 %v165, %v142
  %v187 = vsub.f32 %v166, %v149
  %v188 = vmul.f32 %v184, %v186
  %v189 = vmul.f32 %v185, %v187
  %v190 = vsel %vm132, %v189, 0.0
  %v191 = vadd.f32 %v188, %v190
  %v192 = vrot.slane %v191, 4
  %v193 = vadd.f32 %v191, %v192
  %v194 = vrot.slane %v193, 2
  %v195 = vadd.f32 %v193, %v194
  %v196 = vrot.slane %v195, 1
  %v197 = vadd.f32 %v195, %v196
  %v198 = vmul.f32 %v183, %v197
  %s199 = sadd.s32 0, 0
  %s200 = smul.u32 %s199, 128
  %v201 = vlaneseq
  %v202 = vand.u32 %v201, 127
  %v203 = vstv %s200
  %v204 = vadd.s32 %v203, %v202
  %vm205 = vcmp.lt.s32.totalorder %v204, 4
  %v206 = vsel %vm205, %v198, 0.0
  %v207 = vld [vmem:[%s3] sm:$0xff]
  %v208 = vadd.f32 %v207, %v206
  %209 = vst [vmem:[%s3] sm:$0xff] %v208
  // Predicated region
  $region18: #{skce_loss.1} parent=0 // pred_check
    _
  $region19: #{skce_loss.1} parent=0 // pred_check_branch
    %211 = sbr.rel (0) target = $region21
  $region20: #{skce_loss.1} parent=0 // pred_region
    _
  $region21: #{skce_loss.1} parent=0 // pred_fallthru
    _
  // Predicated region
  $region22: #{skce_loss.1} parent=0 // pred_check
    _
  $region23: #{skce_loss.1} parent=0 // pred_check_branch
    %213 = sbr.rel (0) target = $region25
  $region24: #{skce_loss.1} parent=0 // pred_region
    _
  $region25: #{skce_loss.1} parent=0 // pred_fallthru
    _

</llo_original>
